<compile_context>
chip_gen: v7x
topology: tpu7x:2x2x1
jax: 0.10.0
libtpu: 0.0.40
codegen_flags: <defaults>
</compile_context>

<pallas_src>
import functools

import jax
import jax.numpy as jnp
from jax.experimental import pallas as pl
from jax.experimental.pallas import tpu as pltpu


_TILE = 256  # row / K tile for the tiled (grid) path


def _round_up(v, m):
    return ((v + m - 1) // m) * m


def _vmem_capacity_bytes():
    try:
        info = pltpu.get_tpu_info()
        cap = getattr(info, "vmem_capacity_bytes", None)
        if cap:
            return int(cap)
    except Exception:
        pass
    return 64 * 1024 * 1024  # conservative default (v7x per-core VMEM)


def _compiler_params(dimension_semantics, needed_bytes):
    cap = _vmem_capacity_bytes()
    limit = max(int(needed_bytes) + (8 << 20), 32 << 20)
    limit = min(limit, cap - (2 << 20))
    return pltpu.CompilerParams(dimension_semantics=dimension_semantics,
                                vmem_limit_bytes=int(limit))


# ----------------------------------------------------------------------------
# Fully fused kernels (small-N fast path: whole graph resident in VMEM)
# ----------------------------------------------------------------------------
def _fused_proj_kernel(a_ref, x_ref, w1c_ref, b1_ref, w2_ref, b2_ref, bp_ref,
                       o_ref, *, cout_p):
    a = a_ref[...]                                     # bf16 (Np, Np)
    x = x_ref[...]                                     # bf16 (Np, Cin_p)
    # Combined feature transform [X@W1 | X@Wp] in one MXU pass (f32 accum).
    t = jnp.dot(x, w1c_ref[...], preferred_element_type=jnp.float32)
    h0 = t[:, :cout_p]
    ident = t[:, cout_p:] + bp_ref[...]
    # GCNConv 1 + ReLU
    h1 = jnp.dot(a, h0.astype(jnp.bfloat16), preferred_element_type=jnp.float32)
    h1 = jnp.maximum(h1 + b1_ref[...], 0.0)
    # GCNConv 2
    t2 = jnp.dot(h1.astype(jnp.bfloat16), w2_ref[...],
                 preferred_element_type=jnp.float32)
    h2 = jnp.dot(a, t2.astype(jnp.bfloat16), preferred_element_type=jnp.float32)
    h2 = h2 + b2_ref[...]
    # projected residual + ReLU
    o_ref[...] = jnp.maximum(h2 + ident, 0.0).astype(o_ref.dtype)


def _fused_noproj_kernel(a_ref, x_ref, w1_ref, b1_ref, w2_ref, b2_ref, o_ref):
    a = a_ref[...]
    x = x_ref[...]
    t = jnp.dot(x, w1_ref[...], preferred_element_type=jnp.float32)
    h1 = jnp.dot(a, t.astype(jnp.bfloat16), preferred_element_type=jnp.float32)
    h1 = jnp.maximum(h1 + b1_ref[...], 0.0)
    t2 = jnp.dot(h1.astype(jnp.bfloat16), w2_ref[...],
                 preferred_element_type=jnp.float32)
    h2 = jnp.dot(a, t2.astype(jnp.bfloat16), preferred_element_type=jnp.float32)
    h2 = h2 + b2_ref[...]
    o_ref[...] = jnp.maximum(h2 + x.astype(jnp.float32), 0.0).astype(o_ref.dtype)


# ----------------------------------------------------------------------------
# Tiled kernels (general path): row-tiled feature transform + row/K-tiled
# aggregation with f32 accumulator (pattern P1 + P3).
# ----------------------------------------------------------------------------
def _rowmm_kernel(x_ref, w_ref, o_ref):
    o_ref[...] = jnp.dot(x_ref[...], w_ref[...],
                         preferred_element_type=jnp.float32).astype(o_ref.dtype)


def _agg_kernel(a_ref, t_ref, b_ref, o_ref, acc_ref):
    @pl.when(pl.program_id(1) == 0)
    def _():
        acc_ref[...] = jnp.zeros_like(acc_ref)

    acc_ref[...] += jnp.dot(a_ref[...], t_ref[...],
                            preferred_element_type=jnp.float32)

    @pl.when(pl.program_id(1) == pl.num_programs(1) - 1)
    def _():
        o_ref[...] = jnp.maximum(acc_ref[...] + b_ref[...], 0.0).astype(o_ref.dtype)


def _agg_res_kernel(a_ref, t_ref, b_ref, e_ref, o_ref, acc_ref):
    @pl.when(pl.program_id(1) == 0)
    def _():
        acc_ref[...] = jnp.zeros_like(acc_ref)

    acc_ref[...] += jnp.dot(a_ref[...], t_ref[...],
                            preferred_element_type=jnp.float32)

    @pl.when(pl.program_id(1) == pl.num_programs(1) - 1)
    def _():
        out = acc_ref[...] + b_ref[...] + e_ref[...].astype(jnp.float32)
        o_ref[...] = jnp.maximum(out, 0.0).astype(o_ref.dtype)


def _rowmm(x, w, out_dtype):
    n_p, k = x.shape
    m = w.shape[1]
    grid = (n_p // _TILE,)
    per_step = 2 * (_TILE * k * 2) + k * m * 2 + 2 * (_TILE * m * 4)
    flops = 2 * n_p * k * m
    bytes_acc = x.size * 2 + w.size * 2 * grid[0] + n_p * m * jnp.dtype(out_dtype).itemsize
    return pl.pallas_call(
        _rowmm_kernel,
        out_shape=jax.ShapeDtypeStruct((n_p, m), out_dtype),
        grid=grid,
        in_specs=[pl.BlockSpec((_TILE, k), lambda i: (i, 0)),
                  pl.BlockSpec((k, m), lambda i: (0, 0))],
        out_specs=pl.BlockSpec((_TILE, m), lambda i: (i, 0)),
        compiler_params=_compiler_params(("parallel",), per_step),
        cost_estimate=pl.CostEstimate(flops=int(flops), transcendentals=0,
                                      bytes_accessed=int(bytes_acc)),
    )(x, w)


def _agg(a, t, bias, extra=None, *, out_dtype):
    n_p = a.shape[0]
    c = t.shape[1]
    grid = (n_p // _TILE, n_p // _TILE)

    in_specs = [pl.BlockSpec((_TILE, _TILE), lambda i, k: (i, k)),
                pl.BlockSpec((_TILE, c), lambda i, k: (k, 0)),
                pl.BlockSpec((1, c), lambda i, k: (0, 0))]
    inputs = [a, t, bias]
    kernel = _agg_kernel
    if extra is not None:
        in_specs.append(pl.BlockSpec((_TILE, c), lambda i, k: (i, 0)))
        inputs.append(extra)
        kernel = _agg_res_kernel

    per_step = (2 * (_TILE * _TILE * 2) + 2 * (_TILE * c * 2) + c * 4
                + 2 * (_TILE * c * 2) + 2 * (_TILE * c * 4) + _TILE * c * 4)
    flops = 2 * n_p * n_p * c
    bytes_acc = a.size * 2 + t.size * 2 * grid[0] + n_p * c * 4
    return pl.pallas_call(
        kernel,
        out_shape=jax.ShapeDtypeStruct((n_p, c), out_dtype),
        grid=grid,
        in_specs=in_specs,
        out_specs=pl.BlockSpec((_TILE, c), lambda i, k: (i, 0)),
        scratch_shapes=[pltpu.VMEM((_TILE, c), jnp.float32)],
        compiler_params=_compiler_params(("parallel", "arbitrary"), per_step),
        cost_estimate=pl.CostEstimate(flops=int(flops), transcendentals=0,
                                      bytes_accessed=int(bytes_acc)),
    )(*inputs)


# ----------------------------------------------------------------------------
# Glue: dense GCN-normalized adjacency from edge_index.  Build ONCE per static
# graph and reuse across forward calls (hoisted out of the hot path).
# ----------------------------------------------------------------------------
def normalized_adjacency(edge_index, num_nodes, dtype=jnp.bfloat16):
    # TODO(synk): the sparse edge scatter itself stays plain-JAX glue; a sparse
    # Pallas gather/scatter message-passing kernel is not worthwhile here.
    src = edge_index[0]
    dst = edge_index[1]
    a = jnp.zeros((num_nodes, num_nodes), jnp.float32)
    a = a.at[dst, src].add(1.0)                       # message j -> i in row i
    a = a + jnp.eye(num_nodes, dtype=jnp.float32)     # self-loops
    deg = jnp.sum(a, axis=1)                          # >= 1 thanks to self-loops
    dinv = jax.lax.rsqrt(deg)                         # f32 normalization
    return (a * dinv[:, None] * dinv[None, :]).astype(dtype)


# ----------------------------------------------------------------------------
# Wrapper: pad to TPU-friendly shapes, pick fused vs tiled path, slice back.
# Zero padding is exact: padded bias/weight columns stay zero and A's zero
# padded columns keep padded rows out of real rows; the final slice drops them.
# ----------------------------------------------------------------------------
def residual_gcn_block(x, a_hat, params, *, force_tiled=False):
    n, cin = x.shape
    cout = params["w1"].shape[1]
    has_proj = "wp" in params
    assert a_hat.shape == (n, n)

    cout_p = max(_round_up(cout, 128), 128)
    if has_proj:
        cin_p = max(_round_up(cin, 16), 16)   # contraction dim: sublane quantum only
    else:
        assert cin == cout, "identity residual requires in_channels == out_channels"
        cin_p = cout_p                         # residual add needs matching width

    def pad2(m, rows, cols, dtype):
        m = m.astype(dtype)
        return jnp.pad(m, ((0, rows - m.shape[0]), (0, cols - m.shape[1])))

    b1 = pad2(params["b1"].reshape(1, -1), 1, cout_p, jnp.float32)
    b2 = pad2(params["b2"].reshape(1, -1), 1, cout_p, jnp.float32)
    w2 = pad2(params["w2"], cout_p, cout_p, jnp.bfloat16)

    # --- path choice: fully fused only if everything fits the VMEM budget ----
    n_fused = max(_round_up(n, 128), 128)
    fused_bytes = (n_fused * n_fused * 2           # A (bf16)
                   + n_fused * cin_p * 2           # X (bf16)
                   + (cin_p + cout_p) * 2 * cout_p * 2
                   + n_fused * cout_p * 4          # output (f32)
                   + 4 * n_fused * 2 * cout_p * 4) # f32 intermediates
    budget = int(_vmem_capacity_bytes() * 0.6)
    use_fused = (not force_tiled) and (fused_bytes <= budget)

    if use_fused:
        n_p = n_fused
        a_p = pad2(a_hat, n_p, n_p, jnp.bfloat16)
        x_p = pad2(x, n_p, cin_p, jnp.bfloat16)
        w1 = pad2(params["w1"], cin_p, cout_p, jnp.bfloat16)
        vmem = pl.BlockSpec(memory_space=pltpu.MemorySpace.VMEM)
        flops = (2 * n_p * cin_p * cout_p * (2 if has_proj else 1)
                 + 2 * 2 * n_p * n_p * cout_p + 2 * n_p * cout_p * cout_p)
        bytes_acc = (a_p.size * 2 + x_p.size * 2 + n_p * cout_p * 4
                     + (cin_p + cout_p) * cout_p * 2 * 2)
        cost = pl.CostEstimate(flops=int(flops), transcendentals=0,
                               bytes_accessed=int(bytes_acc))
        if has_proj:
            wp = pad2(params["wp"], cin_p, cout_p, jnp.bfloat16)
            bp = pad2(params["bp"].reshape(1, -1), 1, cout_p, jnp.float32)
            w1c = jnp.concatenate([w1, wp], axis=1)          # (cin_p, 2*cout_p)
            kernel = functools.partial(_fused_proj_kernel, cout_p=cout_p)
            inputs = (a_p, x_p, w1c, b1, w2, b2, bp)
        else:
            kernel = _fused_noproj_kernel
            inputs = (a_p, x_p, w1, b1, w2, b2)
        out_p = pl.pallas_call(
            kernel,
            out_shape=jax.ShapeDtypeStruct((n_p, cout_p), jnp.float32),
            in_specs=[vmem] * len(inputs),
            out_specs=vmem,
            compiler_params=_compiler_params(None, fused_bytes),
            cost_estimate=cost,
        )(*inputs)
        return out_p[:n, :cout]

    # ------------------------- tiled / grid path -----------------------------
    n_p = max(_round_up(n, _TILE), _TILE)
    a_p = pad2(a_hat, n_p, n_p, jnp.bfloat16)
    x_p = pad2(x, n_p, cin_p, jnp.bfloat16)
    w1 = pad2(params["w1"], cin_p, cout_p, jnp.bfloat16)
    if has_proj:
        wp = pad2(params["wp"], cin_p, cout_p, jnp.bfloat16)
        bp = pad2(params["bp"].reshape(1, -1), 1, cout_p, jnp.float32)
        w1c = jnp.concatenate([w1, wp], axis=1)              # (cin_p, 2*cout_p)
        t1 = _rowmm(x_p, w1c, jnp.bfloat16)                  # [X@W1 | X@Wp]
        h0 = t1[:, :cout_p]
        ident = t1[:, cout_p:]
        bias2 = b2 + bp            # fold projection bias into the final epilogue
    else:
        h0 = _rowmm(x_p, w1, jnp.bfloat16)
        ident = x_p
        bias2 = b2
    h1 = _agg(a_p, h0, b1, out_dtype=jnp.bfloat16)           # relu(A@h0 + b1)
    t2 = _rowmm(h1, w2, jnp.bfloat16)                        # h1 @ W2
    out_p = _agg(a_p, t2, bias2, extra=ident, out_dtype=jnp.float32)
    return out_p[:n, :cout]


# ----------------------------------------------------------------------------
# Deterministic parameter init (shapes from the PyTorch __init__)
# ----------------------------------------------------------------------------
def init_params(key, in_channels, out_channels):
    ks = jax.random.split(key, 6)

    def glorot(k, shape):
        fan_in, fan_out = shape
        bound = (6.0 / (fan_in + fan_out)) ** 0.5
        return jax.random.uniform(k, shape, jnp.float32, -bound, bound)

    def small(k, shape, fan_in):
        bound = 1.0 / (float(fan_in) ** 0.5)
        return jax.random.uniform(k, shape, jnp.float32, -bound, bound)

    p = dict(
        w1=glorot(ks[0], (in_channels, out_channels)),
        b1=small(ks[1], (out_channels,), in_channels),
        w2=glorot(ks[2], (out_channels, out_channels)),
        b2=small(ks[3], (out_channels,), out_channels),
    )
    if in_channels != out_channels:
        p["wp"] = small(ks[4], (in_channels, out_channels), in_channels)
        p["bp"] = small(ks[5], (out_channels,), in_channels)
    return p


# ----------------------------------------------------------------------------
# Pure-JAX (f32) sparse reference, matching PyG GCNConv semantics
# ----------------------------------------------------------------------------
def reference_forward(x, edge_index, params, num_nodes):
    src, dst = edge_index[0], edge_index[1]
    loop = jnp.arange(num_nodes, dtype=src.dtype)
    src_f = jnp.concatenate([src, loop])
    dst_f = jnp.concatenate([dst, loop])

    deg = jnp.zeros((num_nodes,), jnp.float32).at[dst_f].add(1.0)
    dinv = jax.lax.rsqrt(deg)
    norm = dinv[src_f] * dinv[dst_f]

    def gcn_conv(h, w, b):
        hw = h @ w
        msg = hw[src_f] * norm[:, None]
        agg = jnp.zeros((num_nodes, w.shape[1]), jnp.float32).at[dst_f].add(msg)
        return agg + b

    h = jax.nn.relu(gcn_conv(x, params["w1"], params["b1"]))
    h = gcn_conv(h, params["w2"], params["b2"])
    if "wp" in params:
        identity = x @ params["wp"] + params["bp"]
    else:
        identity = x
    return jax.nn.relu(h + identity)


def _check(out, ref, name):
    max_err = float(jnp.max(jnp.abs(out - ref)))
    mean_err = float(jnp.mean(jnp.abs(out - ref)))
    # bf16 MXU operands with f32 accumulation: loose max bound, tight mean bound.
    assert max_err < 0.15 and mean_err < 0.02, (name, max_err, mean_err)


# ----------------------------------------------------------------------------
if __name__ == "__main__":
    key = jax.random.PRNGKey(0)
    k_e1, k_x1, k_p1, k_e2, k_x2, k_p2 = jax.random.split(key, 6)

    # ---- Graph 1: projection path (cin != cout) -----------------------------
    n1, e1, cin1, cout1 = 128, 512, 32, 64
    edge_index1 = jax.random.randint(k_e1, (2, e1), 0, n1, dtype=jnp.int32)
    x1 = jax.random.normal(k_x1, (n1, cin1), jnp.float32)
    params1 = init_params(k_p1, cin1, cout1)
    a_hat1 = normalized_adjacency(edge_index1, n1)       # built once, reused
    ref1 = jax.block_until_ready(reference_forward(x1, edge_index1, params1, n1))

    out1 = jax.block_until_ready(residual_gcn_block(x1, a_hat1, params1))
    assert out1.shape == (n1, cout1), out1.shape
    _check(out1, ref1, "fused_proj")

    out1t = jax.block_until_ready(
        residual_gcn_block(x1, a_hat1, params1, force_tiled=True))
    _check(out1t, ref1, "tiled_proj")

    # ---- Graph 2: identity residual (cin == cout) ----------------------------
    n2, e2, c2 = 320, 1280, 64
    edge_index2 = jax.random.randint(k_e2, (2, e2), 0, n2, dtype=jnp.int32)
    x2 = jax.random.normal(k_x2, (n2, c2), jnp.float32)
    params2 = init_params(k_p2, c2, c2)
    a_hat2 = normalized_adjacency(edge_index2, n2)
    ref2 = jax.block_until_ready(reference_forward(x2, edge_index2, params2, n2))

    out2 = jax.block_until_ready(residual_gcn_block(x2, a_hat2, params2))
    assert out2.shape == (n2, c2), out2.shape
    _check(out2, ref2, "fused_noproj")

    out2t = jax.block_until_ready(
        residual_gcn_block(x2, a_hat2, params2, force_tiled=True))
    _check(out2t, ref2, "tiled_noproj")

    print("KERNEL_OK")
</pallas_src>

<mosaic_0001>
module attributes {stable_mosaic.version = 11 : i64} {
  func.func @_fused_proj_kernel(%arg0: memref<128x128xbf16, #tpu.memory_space<vmem>>, %arg1: memref<128x32xbf16, #tpu.memory_space<vmem>>, %arg2: memref<32x256xbf16, #tpu.memory_space<vmem>>, %arg3: memref<1x128xf32, #tpu.memory_space<vmem>>, %arg4: memref<128x128xbf16, #tpu.memory_space<vmem>>, %arg5: memref<1x128xf32, #tpu.memory_space<vmem>>, %arg6: memref<1x128xf32, #tpu.memory_space<vmem>>, %arg7: memref<128x128xf32, #tpu.memory_space<vmem>>) attributes {dimension_semantics = [], scalar_prefetch = 0 : i64, scratch_operands = 0 : i64, tpu.core_type = #tpu.core_type<tc>} {
    %c0 = arith.constant 0 : index
    %c0_0 = arith.constant 0 : index
    %0 = vector.load %arg0[%c0, %c0_0] : memref<128x128xbf16, #tpu.memory_space<vmem>>, vector<128x128xbf16>
    %c0_1 = arith.constant 0 : index
    %c0_2 = arith.constant 0 : index
    %1 = vector.load %arg1[%c0_1, %c0_2] : memref<128x32xbf16, #tpu.memory_space<vmem>>, vector<128x32xbf16>
    %c0_3 = arith.constant 0 : index
    %c0_4 = arith.constant 0 : index
    %2 = vector.load %arg2[%c0_3, %c0_4] : memref<32x256xbf16, #tpu.memory_space<vmem>>, vector<32x256xbf16>
    %cst = arith.constant dense<0.000000e+00> : vector<128x256xf32>
    %3 = tpu.matmul %1, %2, %cst {dimension_numbers = #tpu.dot_dimension_numbers<[1], [0], [0], [1], [0, 0, 1, 1], [], []>} : vector<128x32xbf16>, vector<32x256xbf16>, vector<128x256xf32> -> vector<128x256xf32>
    %4 = vector.extract_strided_slice %3 {offsets = [0, 0], sizes = [128, 128], strides = [1, 1]} : vector<128x256xf32> to vector<128x128xf32>
    %5 = vector.extract_strided_slice %3 {offsets = [0, 128], sizes = [128, 128], strides = [1, 1]} : vector<128x256xf32> to vector<128x128xf32>
    %c0_5 = arith.constant 0 : index
    %c0_6 = arith.constant 0 : index
    %6 = vector.load %arg6[%c0_5, %c0_6] : memref<1x128xf32, #tpu.memory_space<vmem>>, vector<1x128xf32>
    %7 = vector.broadcast %6 : vector<1x128xf32> to vector<128x128xf32>
    %8 = arith.addf %5, %7 : vector<128x128xf32>
    %9 = arith.truncf %4 : vector<128x128xf32> to vector<128x128xbf16>
    %cst_7 = arith.constant dense<0.000000e+00> : vector<128x128xf32>
    %10 = tpu.matmul %0, %9, %cst_7 {dimension_numbers = #tpu.dot_dimension_numbers<[1], [0], [0], [1], [0, 0, 1, 1], [], []>} : vector<128x128xbf16>, vector<128x128xbf16>, vector<128x128xf32> -> vector<128x128xf32>
    %c0_8 = arith.constant 0 : index
    %c0_9 = arith.constant 0 : index
    %11 = vector.load %arg3[%c0_8, %c0_9] : memref<1x128xf32, #tpu.memory_space<vmem>>, vector<1x128xf32>
    %12 = vector.broadcast %11 : vector<1x128xf32> to vector<128x128xf32>
    %13 = arith.addf %10, %12 : vector<128x128xf32>
    %cst_10 = arith.constant 0.000000e+00 : f32
    %14 = vector.broadcast %cst_10 : f32 to vector<128x128xf32>
    %15 = arith.maximumf %13, %14 : vector<128x128xf32>
    %16 = arith.truncf %15 : vector<128x128xf32> to vector<128x128xbf16>
    %c0_11 = arith.constant 0 : index
    %c0_12 = arith.constant 0 : index
    %17 = vector.load %arg4[%c0_11, %c0_12] : memref<128x128xbf16, #tpu.memory_space<vmem>>, vector<128x128xbf16>
    %cst_13 = arith.constant dense<0.000000e+00> : vector<128x128xf32>
    %18 = tpu.matmul %16, %17, %cst_13 {dimension_numbers = #tpu.dot_dimension_numbers<[1], [0], [0], [1], [0, 0, 1, 1], [], []>} : vector<128x128xbf16>, vector<128x128xbf16>, vector<128x128xf32> -> vector<128x128xf32>
    %19 = arith.truncf %18 : vector<128x128xf32> to vector<128x128xbf16>
    %cst_14 = arith.constant dense<0.000000e+00> : vector<128x128xf32>
    %20 = tpu.matmul %0, %19, %cst_14 {dimension_numbers = #tpu.dot_dimension_numbers<[1], [0], [0], [1], [0, 0, 1, 1], [], []>} : vector<128x128xbf16>, vector<128x128xbf16>, vector<128x128xf32> -> vector<128x128xf32>
    %c0_15 = arith.constant 0 : index
    %c0_16 = arith.constant 0 : index
    %21 = vector.load %arg5[%c0_15, %c0_16] : memref<1x128xf32, #tpu.memory_space<vmem>>, vector<1x128xf32>
    %22 = vector.broadcast %21 : vector<1x128xf32> to vector<128x128xf32>
    %23 = arith.addf %20, %22 : vector<128x128xf32>
    %24 = arith.addf %23, %8 : vector<128x128xf32>
    %cst_17 = arith.constant 0.000000e+00 : f32
    %25 = vector.broadcast %cst_17 : f32 to vector<128x128xf32>
    %26 = arith.maximumf %24, %25 : vector<128x128xf32>
    %c0_18 = arith.constant 0 : index
    %c0_19 = arith.constant 0 : index
    %27 = vector.load %arg7[%c0_18, %c0_19] : memref<128x128xf32, #tpu.memory_space<vmem>>, vector<128x128xf32>
    tpu.vector_store %arg7[%c0_18, %c0_19], %26 {strides = array<i32>} : memref<128x128xf32, #tpu.memory_space<vmem>>, vector<128x128xf32>,
    return
  }
}

</mosaic_0001>

<llo_original>
// kernel: tpu_custom_call.1
$region0: #{tpu_custom_call.1}
  #allocation0 [shape = 'u32[]', space=smem, size = 0x4, offset = 0x4, fixed_abs, tag = 'smem constant byte address 0x4 - core index']
  #allocation1 [shape = 'u32[144,128]{1,0:T(1,128)}', space=vmem, size = 0x12000, scoped, tag = 'internal scratch']
  %s0 = inlined_call_operand.vmem [shape: bf16[128,128], index: 0, kind: input, shape index: {}]
  %s1 = inlined_call_operand.vmem [shape: bf16[128,32], index: 1, kind: input, shape index: {}]
  %s2 = inlined_call_operand.hbm [shape: bf16[32,256], index: 2, kind: input, shape index: {}]
  %s3 = inlined_call_operand.vmem [shape: f32[1,128], index: 3, kind: input, shape index: {}]
  %s4 = inlined_call_operand.hbm [shape: bf16[128,128], index: 4, kind: input, shape index: {}]
  %s5 = inlined_call_operand.vmem [shape: f32[1,128], index: 5, kind: input, shape index: {}]
  %s6 = inlined_call_operand.vmem [shape: f32[1,128], index: 6, kind: input, shape index: {}]
  %s7 = inlined_call_operand.hbm [shape: f32[128,128], index: 7, kind: output, shape index: {}]
  %s8 = sld [smem:[#allocation0]]
  $region46: #{tpu_custom_call.1} parent=0
    _
  %s10 = ssub.s32 1, %s8
  %s11 = scalar_select 0, %s10, %s8
  $region1: #{tpu_custom_call.1} parent=0
    #allocation2 [shape = 'u8[16384]{0}', space=vmem, size = 0x4000, scoped, tag = 'input window, operand 2, single buffered']
    #allocation3 [shape = 's32[1]{0}', space=sflag, size = 0x4, scoped, tag = 'scoped memory for tpu_custom_call.1']
    #allocation4 [shape = 's32[1]{0}', space=sflag, size = 0x4, scoped, tag = 'scoped memory for tpu_custom_call.1']
    #allocation5 [shape = 'u8[32768]{0}', space=vmem, size = 0x8000, scoped, tag = 'input window, operand 4, single buffered']
    #allocation6 [shape = 's32[1]{0}', space=sflag, size = 0x4, scoped, tag = 'scoped memory for tpu_custom_call.1']
    #allocation7 [shape = 'u8[65536]{0}', space=vmem, size = 0x10000, scoped, tag = 'output window, operand 0, single buffered']
    %12 = vsyncpa [#allocation3], 0
    %13 = vsyncpa [#allocation6], 0
    %14 = vsyncpa [#allocation4], 0
    // Predicated region
    $region2: #{tpu_custom_call.1} parent=1 // pred_check
      _
    $region3: #{tpu_custom_call.1} parent=1 // pred_check_branch
      %16 = sbr.rel (0) target = $region5
    $region4: #{tpu_custom_call.1} parent=1 // pred_region
      _
    $region5: #{tpu_custom_call.1} parent=1 // pred_fallthru
      _
    // Predicated region
    $region6: #{tpu_custom_call.1} parent=1 // pred_check
      _
    $region7: #{tpu_custom_call.1} parent=1 // pred_check_branch
      %18 = sbr.rel (0) target = $region9
    $region8: #{tpu_custom_call.1} parent=1 // pred_region
      _
    $region9: #{tpu_custom_call.1} parent=1 // pred_fallthru
      _
    // Predicated region
    $region10: #{tpu_custom_call.1} parent=1 // pred_check
      _
    $region11: #{tpu_custom_call.1} parent=1 // pred_check_branch
      %20 = sbr.rel (0) target = $region13
    $region12: #{tpu_custom_call.1} parent=1 // pred_region
      %s22 = ssub.s32 512, 512
      %23 = vsyncadd [#allocation3], %s22
      %s24 = sshll.u32 [#allocation2], 4
      %s25 = int_to_ptr.vmem [resolvable:$true] %s24
      %30 = dma.hbm_to_vmem [thread:$0]  %s2, 512, %s25, [#allocation3], 128, 128, 8
    $region13: #{tpu_custom_call.1} parent=1 // pred_fallthru
      _
    // Predicated region
    $region14: #{tpu_custom_call.1} parent=1 // pred_check
      _
    $region15: #{tpu_custom_call.1} parent=1 // pred_check_branch
      %32 = sbr.rel (0) target = $region17
    $region16: #{tpu_custom_call.1} parent=1 // pred_region
      _
    $region17: #{tpu_custom_call.1} parent=1 // pred_fallthru
      _
    // Predicated region
    $region18: #{tpu_custom_call.1} parent=1 // pred_check
      _
    $region19: #{tpu_custom_call.1} parent=1 // pred_check_branch
      %34 = sbr.rel (0) target = $region21
    $region20: #{tpu_custom_call.1} parent=1 // pred_region
      %s36 = ssub.s32 1024, 1024
      %37 = vsyncadd [#allocation6], %s36
      %s38 = sshll.u32 [#allocation5], 4
      %s39 = int_to_ptr.vmem [resolvable:$true] %s38
      %44 = dma.hbm_to_vmem [thread:$0]  %s4, 1024, %s39, [#allocation6], 64, 64, 4
    $region21: #{tpu_custom_call.1} parent=1 // pred_fallthru
      _
    // Predicated region
    $region22: #{tpu_custom_call.1} parent=1 // pred_check
      _
    $region23: #{tpu_custom_call.1} parent=1 // pred_check_branch
      %46 = sbr.rel (0) target = $region25
    $region24: #{tpu_custom_call.1} parent=1 // pred_region
      _
    $region25: #{tpu_custom_call.1} parent=1 // pred_fallthru
      _
    // Predicated region
    $region26: #{tpu_custom_call.1} parent=1 // pred_check
      _
    $region27: #{tpu_custom_call.1} parent=1 // pred_check_branch
      %48 = sbr.rel (0) target = $region29
    $region28: #{tpu_custom_call.1} parent=1 // pred_region
      _
    $region29: #{tpu_custom_call.1} parent=1 // pred_fallthru
      _
    // Predicated region
    $region30: #{tpu_custom_call.1} parent=1 // pred_check
      _
    $region31: #{tpu_custom_call.1} parent=1 // pred_check_branch
      %50 = sbr.rel (0) target = $region33
    $region32: #{tpu_custom_call.1} parent=1 // pred_region
      %51 = dma.done [#allocation3], 512
    $region33: #{tpu_custom_call.1} parent=1 // pred_fallthru
      _
    // Predicated region
    $region34: #{tpu_custom_call.1} parent=1 // pred_check
      _
    $region35: #{tpu_custom_call.1} parent=1 // pred_check_branch
      %53 = sbr.rel (0) target = $region37
    $region36: #{tpu_custom_call.1} parent=1 // pred_region
      %54 = dma.done [#allocation6], 1024
    $region37: #{tpu_custom_call.1} parent=1 // pred_fallthru
      _
    %v56 = vld [vmem:[%s0] sm:$0xf]
    %v57 = vld [vmem:[%s0 + $0x4] sm:$0xf]
    %v58 = vld [vmem:[%s0 + $0x8] sm:$0xf]
    %v59 = vld [vmem:[%s0 + $0xc] sm:$0xf]
    %v60 = vld [vmem:[%s0 + $0x10] sm:$0xf]
    %v61 = vld [vmem:[%s0 + $0x14] sm:$0xf]
    %v62 = vld [vmem:[%s0 + $0x18] sm:$0xf]
    %v63 = vld [vmem:[%s0 + $0x1c] sm:$0xf]
    %v64 = vld [vmem:[%s0 + $0x20] sm:$0xf]
    %v65 = vld [vmem:[%s0 + $0x24] sm:$0xf]
    %v66 = vld [vmem:[%s0 + $0x28] sm:$0xf]
    %v67 = vld [vmem:[%s0 + $0x2c] sm:$0xf]
    %v68 = vld [vmem:[%s0 + $0x30] sm:$0xf]
    %v69 = vld [vmem:[%s0 + $0x34] sm:$0xf]
    %v70 = vld [vmem:[%s0 + $0x38] sm:$0xf]
    %v71 = vld [vmem:[%s0 + $0x3c] sm:$0xf]
    %v72 = vld [vmem:[%s1] sm:$0xf]
    %v73 = vld [vmem:[%s1 + $0x4] sm:$0xf]
    %v74 = vld [vmem:[%s1 + $0x8] sm:$0xf]
    %v75 = vld [vmem:[%s1 + $0xc] sm:$0xf]
    %v76 = vld [vmem:[%s1 + $0x10] sm:$0xf]
    %v77 = vld [vmem:[%s1 + $0x14] sm:$0xf]
    %v78 = vld [vmem:[%s1 + $0x18] sm:$0xf]
    %v79 = vld [vmem:[%s1 + $0x1c] sm:$0xf]
    %v80 = vld [vmem:[%s1 + $0x20] sm:$0xf]
    %v81 = vld [vmem:[%s1 + $0x24] sm:$0xf]
    %v82 = vld [vmem:[%s1 + $0x28] sm:$0xf]
    %v83 = vld [vmem:[%s1 + $0x2c] sm:$0xf]
    %v84 = vld [vmem:[%s1 + $0x30] sm:$0xf]
    %v85 = vld [vmem:[%s1 + $0x34] sm:$0xf]
    %v86 = vld [vmem:[%s1 + $0x38] sm:$0xf]
    %v87 = vld [vmem:[%s1 + $0x3c] sm:$0xf]
    %v88 = vld [vmem:[#allocation2] sm:$0xff]
    %v89 = vld [vmem:[#allocation2 + $0x8] sm:$0xff]
    %v90 = vld [vmem:[#allocation2 + $0x10] sm:$0xff]
    %v91 = vld [vmem:[#allocation2 + $0x18] sm:$0xff]
    %v108 = vunpack.c.l.b16 %v72
    %v109 = vunpack.c.l.b16 %v73
    %v110 = vunpack.c.l.b16 %v74
    %v111 = vunpack.c.l.b16 %v75
    %v112 = vunpack.c.l.b16 %v76
    %v113 = vunpack.c.l.b16 %v77
    %v114 = vunpack.c.l.b16 %v78
    %v115 = vunpack.c.l.b16 %v79
    %v116 = vunpack.c.l.b16 %v80
    %v117 = vunpack.c.l.b16 %v81
    %v118 = vunpack.c.l.b16 %v82
    %v119 = vunpack.c.l.b16 %v83
    %v120 = vunpack.c.l.b16 %v84
    %v121 = vunpack.c.l.b16 %v85
    %v122 = vunpack.c.l.b16 %v86
    %v123 = vunpack.c.l.b16 %v87
    %v124 = vpack.c.b16 %v109, %v108
    %v125 = vpack.c.b16 %v111, %v110
    %v126 = vpack.c.b16 %v113, %v112
    %v127 = vpack.c.b16 %v115, %v114
    %v128 = vpack.c.b16 %v117, %v116
    %v129 = vpack.c.b16 %v119, %v118
    %v130 = vpack.c.b16 %v121, %v120
    %v131 = vpack.c.b16 %v123, %v122
    %v136 = vunpack.c.l.b16 %v88
    %v137 = vunpack.c.h.b16 %v88
    %v138 = vunpack.c.l.b16 %v89
    %v139 = vunpack.c.h.b16 %v89
    %v140 = vunpack.c.l.b16 %v90
    %v141 = vunpack.c.h.b16 %v90
    %v142 = vunpack.c.l.b16 %v91
    %v143 = vunpack.c.h.b16 %v91
    %v144 = vpack.c.b16 %v138, %v136
    %v145 = vpack.c.b16 %v139, %v137
    %v146 = vpack.c.b16 %v142, %v140
    %v147 = vpack.c.b16 %v143, %v141
    %vm152 = vcmask 261120
    %v154 = vsel %vm152, %v124, 0
    %v157 = vsel %vm152, %v125, 0
    %v160 = vsel %vm152, %v126, 0
    %v163 = vsel %vm152, %v127, 0
    %v166 = vsel %vm152, %v128, 0
    %v169 = vsel %vm152, %v129, 0
    %v172 = vsel %vm152, %v130, 0
    %v175 = vsel %vm152, %v131, 0
    %177 = vmatprep.subr.bf16.mxu0 %v145
    %178 = vmatpush1.bf16.msra.mxu0 %v144
    %179 = vmatprep.subr.bf16.mxu0 %v147
    %180 = vmatpush1.bf16.msra.mxu0 %v146
    %181 = vmatprep.subr.bf16.mxu0 0
    %182 = vmatpush1.bf16.msra.mxu0 0
    %183 = vmatprep.subr.bf16.mxu0 0
    %184 = vmatpush1.bf16.msra.mxu0 0
    %185 = vmatprep.subr.bf16.mxu0 0
    %186 = vmatpush1.bf16.msra.mxu0 0
    %187 = vmatprep.subr.bf16.mxu0 0
    %188 = vmatpush1.bf16.msra.mxu0 0
    %189 = vmatprep.subr.bf16.mxu0 0
    %190 = vmatpush1.bf16.msra.mxu0 0
    %191 = vmatprep.subr.bf16.mxu0 0
    %192 = vmatpush1.bf16.msra.mxu0 0
    %193 = vmatprep.subr.bf16.mxu0 0
    %194 = vmatpush1.bf16.msra.mxu0 0
    %195 = vmatprep.subr.bf16.mxu0 0
    %196 = vmatpush1.bf16.msra.mxu0 0
    %197 = vmatprep.subr.bf16.mxu0 0
    %198 = vmatpush1.bf16.msra.mxu0 0
    %199 = vmatprep.subr.bf16.mxu0 0
    %200 = vmatpush1.bf16.msra.mxu0 0
    %201 = vmatprep.subr.bf16.mxu0 0
    %202 = vmatpush1.bf16.msra.mxu0 0
    %203 = vmatprep.subr.bf16.mxu0 0
    %204 = vmatpush1.bf16.msra.mxu0 0
    %205 = vmatprep.subr.bf16.mxu0 0
    %206 = vmatpush1.bf16.msra.mxu0 0
    %207 = vmatprep.subr.bf16.mxu0 0
    %208 = vmatpush1.bf16.msra.mxu0 0
    %209 = vmatprep.mubr.bf16.mxu0 0
    %210 = vmatmul.mubr.bf16.gmra.mrb[0].mxu0 %v154
    %v211 = vpop.f32.mrb[0].mxu0
    %v212 = vadd.f32 0.0, %v211
    %v213 = vpop.f32.mrb[0].mxu0
    %v214 = vadd.f32 0.0, %v213
    %v215 = vpop.f32.mrb[0].mxu0
    %v216 = vadd.f32 0.0, %v215
    %v217 = vpop.f32.mrb[0].mxu0
    %v218 = vadd.f32 0.0, %v217
    %219 = vmatprep.mubr.bf16.mxu0 0
    %220 = vmatmul.mubr.bf16.gmra.mrb[0].mxu0 %v157
    %v221 = vpop.f32.mrb[0].mxu0
    %v222 = vadd.f32 0.0, %v221
    %v223 = vpop.f32.mrb[0].mxu0
    %v224 = vadd.f32 0.0, %v223
    %v225 = vpop.f32.mrb[0].mxu0
    %v226 = vadd.f32 0.0, %v225
    %v227 = vpop.f32.mrb[0].mxu0
    %v228 = vadd.f32 0.0, %v227
    %229 = vmatprep.mubr.bf16.mxu0 0
    %230 = vmatmul.mubr.bf16.gmra.mrb[0].mxu0 %v160
    %v231 = vpop.f32.mrb[0].mxu0
    %v232 = vadd.f32 0.0, %v231
    %v233 = vpop.f32.mrb[0].mxu0
    %v234 = vadd.f32 0.0, %v233
    %v235 = vpop.f32.mrb[0].mxu0
    %v236 = vadd.f32 0.0, %v235
    %v237 = vpop.f32.mrb[0].mxu0
    %v238 = vadd.f32 0.0, %v237
    %239 = vmatprep.mubr.bf16.mxu0 0
    %240 = vmatmul.mubr.bf16.gmra.mrb[0].mxu0 %v163
    %v241 = vpop.f32.mrb[0].mxu0
    %v242 = vadd.f32 0.0, %v241
    %v243 = vpop.f32.mrb[0].mxu0
    %v244 = vadd.f32 0.0, %v243
    %v245 = vpop.f32.mrb[0].mxu0
    %v246 = vadd.f32 0.0, %v245
    %v247 = vpop.f32.mrb[0].mxu0
    %v248 = vadd.f32 0.0, %v247
    %249 = vmatprep.mubr.bf16.mxu0 0
    %250 = vmatmul.mubr.bf16.gmra.mrb[0].mxu0 %v166
    %v251 = vpop.f32.mrb[0].mxu0
    %v252 = vadd.f32 0.0, %v251
    %v253 = vpop.f32.mrb[0].mxu0
    %v254 = vadd.f32 0.0, %v253
    %v255 = vpop.f32.mrb[0].mxu0
    %v256 = vadd.f32 0.0, %v255
    %v257 = vpop.f32.mrb[0].mxu0
    %v258 = vadd.f32 0.0, %v257
    %259 = vmatprep.mubr.bf16.mxu0 0
    %260 = vmatmul.mubr.bf16.gmra.mrb[0].mxu0 %v169
    %v261 = vpop.f32.mrb[0].mxu0
    %v262 = vadd.f32 0.0, %v261
    %v263 = vpop.f32.mrb[0].mxu0
    %v264 = vadd.f32 0.0, %v263
    %v265 = vpop.f32.mrb[0].mxu0
    %v266 = vadd.f32 0.0, %v265
    %v267 = vpop.f32.mrb[0].mxu0
    %v268 = vadd.f32 0.0, %v267
    %269 = vmatprep.mubr.bf16.mxu0 0
    %270 = vmatmul.mubr.bf16.gmra.mrb[0].mxu0 %v172
    %v271 = vpop.f32.mrb[0].mxu0
    %v272 = vadd.f32 0.0, %v271
    %v273 = vpop.f32.mrb[0].mxu0
    %v274 = vadd.f32 0.0, %v273
    %v275 = vpop.f32.mrb[0].mxu0
    %v276 = vadd.f32 0.0, %v275
    %v277 = vpop.f32.mrb[0].mxu0
    %v278 = vadd.f32 0.0, %v277
    %279 = vmatprep.mubr.bf16.mxu0 0
    %280 = vmatmul.mubr.bf16.gmra.mrb[0].mxu0 %v175
    %v281 = vpop.f32.mrb[0].mxu0
    %v282 = vadd.f32 0.0, %v281
    %v283 = vpop.f32.mrb[0].mxu0
    %v284 = vadd.f32 0.0, %v283
    %v285 = vpop.f32.mrb[0].mxu0
    %v286 = vadd.f32 0.0, %v285
    %v287 = vpop.f32.mrb[0].mxu0
    %v288 = vadd.f32 0.0, %v287
    %289 = vdwg.mxu0
    %v290 = vld [vmem:[%s6] sm:$0x1]
    %v292 = vlaneseq
    %v293 = vshrl.u32 %v292, 7
    %v294 = vsub.s32 0, %v293
    %v295 = vrot.slane %v290, %v294
    %v297 = vadd.f32 %v214, %v295
    %v298 = vadd.f32 %v218, %v295
    %v299 = vadd.f32 %v224, %v295
    %v300 = vadd.f32 %v228, %v295
    %v301 = vadd.f32 %v234, %v295
    %v302 = vadd.f32 %v238, %v295
    %v303 = vadd.f32 %v244, %v295
    %v304 = vadd.f32 %v248, %v295
    %v305 = vadd.f32 %v254, %v295
    %v306 = vadd.f32 %v258, %v295
    %v307 = vadd.f32 %v264, %v295
    %v308 = vadd.f32 %v268, %v295
    %v309 = vadd.f32 %v274, %v295
    %v310 = vadd.f32 %v278, %v295
    %v311 = vadd.f32 %v284, %v295
    %v312 = vadd.f32 %v288, %v295
    %v313 = vpack.c.bf16 %v216, %v212
    %v314 = vpack.c.bf16 %v226, %v222
    %v315 = vpack.c.bf16 %v236, %v232
    %v316 = vpack.c.bf16 %v246, %v242
    %v317 = vpack.c.bf16 %v256, %v252
    %v318 = vpack.c.bf16 %v266, %v262
    %v319 = vpack.c.bf16 %v276, %v272
    %v320 = vpack.c.bf16 %v286, %v282
    %v321 = vld [vmem:[%s3] sm:$0x1]
    %v323 = vlaneseq
    %v324 = vshrl.u32 %v323, 7
    %v325 = vsub.s32 0, %v324
    %v326 = vrot.slane %v321, %v325
    %v344 = vunpack.c.l.b16 %v56
    %v345 = vunpack.c.l.b16 %v57
    %v346 = vunpack.c.l.b16 %v58
    %v347 = vunpack.c.l.b16 %v59
    %v348 = vunpack.c.l.b16 %v60
    %v349 = vunpack.c.l.b16 %v61
    %v350 = vunpack.c.l.b16 %v62
    %v351 = vunpack.c.l.b16 %v63
    %v352 = vunpack.c.l.b16 %v64
    %v353 = vunpack.c.l.b16 %v65
    %v354 = vunpack.c.l.b16 %v66
    %v355 = vunpack.c.l.b16 %v67
    %v356 = vunpack.c.l.b16 %v68
    %v357 = vunpack.c.l.b16 %v69
    %v358 = vunpack.c.l.b16 %v70
    %v359 = vunpack.c.l.b16 %v71
    %v360 = vpack.c.b16 %v345, %v344
    %v361 = vpack.c.b16 %v347, %v346
    %v362 = vpack.c.b16 %v349, %v348
    %v363 = vpack.c.b16 %v351, %v350
    %v364 = vpack.c.b16 %v353, %v352
    %v365 = vpack.c.b16 %v355, %v354
    %v366 = vpack.c.b16 %v357, %v356
    %v367 = vpack.c.b16 %v359, %v358
    %376 = vmatprep.subr.bf16.mxu0 0
    %377 = vmatpush1.bf16.msra.mxu0 %v313
    %378 = vmatprep.subr.bf16.mxu0 0
    %379 = vmatpush1.bf16.msra.mxu0 %v314
    %380 = vmatprep.subr.bf16.mxu0 0
    %381 = vmatpush1.bf16.msra.mxu0 %v315
    %382 = vmatprep.subr.bf16.mxu0 0
    %383 = vmatpush1.bf16.msra.mxu0 %v316
    %384 = vmatprep.subr.bf16.mxu0 0
    %385 = vmatpush1.bf16.msra.mxu0 %v317
    %386 = vmatprep.subr.bf16.mxu0 0
    %387 = vmatpush1.bf16.msra.mxu0 %v318
    %388 = vmatprep.subr.bf16.mxu0 0
    %389 = vmatpush1.bf16.msra.mxu0 %v319
    %390 = vmatprep.subr.bf16.mxu0 0
    %391 = vmatpush1.bf16.msra.mxu0 %v320
    %392 = vmatprep.subr.bf16.mxu0 0
    %393 = vmatpush1.bf16.msra.mxu0 0
    %394 = vmatprep.subr.bf16.mxu0 0
    %395 = vmatpush1.bf16.msra.mxu0 0
    %396 = vmatprep.subr.bf16.mxu0 0
    %397 = vmatpush1.bf16.msra.mxu0 0
    %398 = vmatprep.subr.bf16.mxu0 0
    %399 = vmatpush1.bf16.msra.mxu0 0
    %400 = vmatprep.subr.bf16.mxu0 0
    %401 = vmatpush1.bf16.msra.mxu0 0
    %402 = vmatprep.subr.bf16.mxu0 0
    %403 = vmatpush1.bf16.msra.mxu0 0
    %404 = vmatprep.subr.bf16.mxu0 0
    %405 = vmatpush1.bf16.msra.mxu0 0
    %406 = vmatprep.subr.bf16.mxu0 0
    %407 = vmatpush1.bf16.msra.mxu0 0
    %408 = vmatprep.mubr.bf16.mxu0 0
    %409 = vmatmul.mubr.bf16.gmra.mrb[0].mxu0 %v360
    %v410 = vpop.f32.mrb[0].mxu0
    %v411 = vadd.f32 %v326, %v410
    %v412 = vpop.f32.mrb[0].mxu0
    %v413 = vpop.f32.mrb[0].mxu0
    %v414 = vadd.f32 %v326, %v413
    %v415 = vpop.f32.mrb[0].mxu0
    %416 = vmatprep.mubr.bf16.mxu0 0
    %417 = vmatmul.mubr.bf16.gmra.mrb[0].mxu0 %v361
    %v418 = vpop.f32.mrb[0].mxu0
    %v419 = vadd.f32 %v326, %v418
    %v420 = vpop.f32.mrb[0].mxu0
    %v421 = vpop.f32.mrb[0].mxu0
    %v422 = vadd.f32 %v326, %v421
    %v423 = vpop.f32.mrb[0].mxu0
    %424 = vmatprep.mubr.bf16.mxu0 0
    %425 = vmatmul.mubr.bf16.gmra.mrb[0].mxu0 %v362
    %v426 = vpop.f32.mrb[0].mxu0
    %v427 = vadd.f32 %v326, %v426
    %v428 = vpop.f32.mrb[0].mxu0
    %v429 = vpop.f32.mrb[0].mxu0
    %v430 = vadd.f32 %v326, %v429
    %v431 = vpop.f32.mrb[0].mxu0
    %432 = vmatprep.mubr.bf16.mxu0 0
    %433 = vmatmul.mubr.bf16.gmra.mrb[0].mxu0 %v363
    %v434 = vpop.f32.mrb[0].mxu0
    %v435 = vadd.f32 %v326, %v434
    %v436 = vpop.f32.mrb[0].mxu0
    %v437 = vpop.f32.mrb[0].mxu0
    %v438 = vadd.f32 %v326, %v437
    %v439 = vpop.f32.mrb[0].mxu0
    %440 = vmatprep.mubr.bf16.mxu0 0
    %441 = vmatmul.mubr.bf16.gmra.mrb[0].mxu0 %v364
    %v442 = vpop.f32.mrb[0].mxu0
    %v443 = vadd.f32 %v326, %v442
    %v444 = vpop.f32.mrb[0].mxu0
    %v445 = vpop.f32.mrb[0].mxu0
    %v446 = vadd.f32 %v326, %v445
    %v447 = vpop.f32.mrb[0].mxu0
    %448 = vmatprep.mubr.bf16.mxu0 0
    %449 = vmatmul.mubr.bf16.gmra.mrb[0].mxu0 %v365
    %v450 = vpop.f32.mrb[0].mxu0
    %v451 = vadd.f32 %v326, %v450
    %v452 = vpop.f32.mrb[0].mxu0
    %v453 = vpop.f32.mrb[0].mxu0
    %v454 = vadd.f32 %v326, %v453
    %v455 = vpop.f32.mrb[0].mxu0
    %456 = vmatprep.mubr.bf16.mxu0 0
    %457 = vmatmul.mubr.bf16.gmra.mrb[0].mxu0 %v366
    %v458 = vpop.f32.mrb[0].mxu0
    %v459 = vadd.f32 %v326, %v458
    %v460 = vpop.f32.mrb[0].mxu0
    %v461 = vpop.f32.mrb[0].mxu0
    %v462 = vadd.f32 %v326, %v461
    %v463 = vpop.f32.mrb[0].mxu0
    %464 = vmatprep.mubr.bf16.mxu0 0
    %465 = vmatmul.mubr.bf16.gmra.mrb[0].mxu0 %v367
    %v466 = vpop.f32.mrb[0].mxu0
    %v467 = vadd.f32 %v326, %v466
    %v468 = vpop.f32.mrb[0].mxu0
    %v469 = vpop.f32.mrb[0].mxu0
    %v470 = vadd.f32 %v326, %v469
    %v471 = vpop.f32.mrb[0].mxu0
    %472 = vdwg.mxu0
    %v473 = vmax.f32 %v411, 0.0
    %v474 = vmax.f32 %v414, 0.0
    %v475 = vmax.f32 %v419, 0.0
    %v476 = vmax.f32 %v422, 0.0
    %v477 = vmax.f32 %v427, 0.0
    %v478 = vmax.f32 %v430, 0.0
    %v479 = vmax.f32 %v435, 0.0
    %v480 = vmax.f32 %v438, 0.0
    %v481 = vmax.f32 %v443, 0.0
    %v482 = vmax.f32 %v446, 0.0
    %v483 = vmax.f32 %v451, 0.0
    %v484 = vmax.f32 %v454, 0.0
    %v485 = vmax.f32 %v459, 0.0
    %v486 = vmax.f32 %v462, 0.0
    %v487 = vmax.f32 %v467, 0.0
    %v488 = vmax.f32 %v470, 0.0
    %v489 = vpack.c.bf16 %v474, %v473
    %v490 = vpack.c.bf16 %v476, %v475
    %v491 = vpack.c.bf16 %v478, %v477
    %v492 = vpack.c.bf16 %v480, %v479
    %v493 = vpack.c.bf16 %v482, %v481
    %v494 = vpack.c.bf16 %v484, %v483
    %v495 = vpack.c.bf16 %v486, %v485
    %v496 = vpack.c.bf16 %v488, %v487
    %v497 = vld [vmem:[#allocation5] sm:$0xf]
    %v498 = vld [vmem:[#allocation5 + $0x4] sm:$0xf]
    %v499 = vld [vmem:[#allocation5 + $0x8] sm:$0xf]
    %v500 = vld [vmem:[#allocation5 + $0xc] sm:$0xf]
    %v501 = vld [vmem:[#allocation5 + $0x10] sm:$0xf]
    %v502 = vld [vmem:[#allocation5 + $0x14] sm:$0xf]
    %v503 = vld [vmem:[#allocation5 + $0x18] sm:$0xf]
    %v504 = vld [vmem:[#allocation5 + $0x1c] sm:$0xf]
    %v505 = vld [vmem:[#allocation5 + $0x20] sm:$0xf]
    %v506 = vld [vmem:[#allocation5 + $0x24] sm:$0xf]
    %v507 = vld [vmem:[#allocation5 + $0x28] sm:$0xf]
    %v508 = vld [vmem:[#allocation5 + $0x2c] sm:$0xf]
    %v509 = vld [vmem:[#allocation5 + $0x30] sm:$0xf]
    %v510 = vld [vmem:[#allocation5 + $0x34] sm:$0xf]
    %v511 = vld [vmem:[#allocation5 + $0x38] sm:$0xf]
    %v512 = vld [vmem:[#allocation5 + $0x3c] sm:$0xf]
    %v529 = vunpack.c.l.b16 %v497
    %v530 = vunpack.c.l.b16 %v498
    %v531 = vunpack.c.l.b16 %v499
    %v532 = vunpack.c.l.b16 %v500
    %v533 = vunpack.c.l.b16 %v501
    %v534 = vunpack.c.l.b16 %v502
    %v535 = vunpack.c.l.b16 %v503
    %v536 = vunpack.c.l.b16 %v504
    %v537 = vunpack.c.l.b16 %v505
    %v538 = vunpack.c.l.b16 %v506
    %v539 = vunpack.c.l.b16 %v507
    %v540 = vunpack.c.l.b16 %v508
    %v541 = vunpack.c.l.b16 %v509
    %v542 = vunpack.c.l.b16 %v510
    %v543 = vunpack.c.l.b16 %v511
    %v544 = vunpack.c.l.b16 %v512
    %v545 = vpack.c.b16 %v530, %v529
    %v546 = vpack.c.b16 %v532, %v531
    %v547 = vpack.c.b16 %v534, %v533
    %v548 = vpack.c.b16 %v536, %v535
    %v549 = vpack.c.b16 %v538, %v537
    %v550 = vpack.c.b16 %v540, %v539
    %v551 = vpack.c.b16 %v542, %v541
    %v552 = vpack.c.b16 %v544, %v543
    %561 = vmatprep.subr.bf16.mxu0 0
    %562 = vmatpush1.bf16.msra.mxu0 %v545
    %563 = vmatprep.subr.bf16.mxu0 0
    %564 = vmatpush1.bf16.msra.mxu0 %v546
    %565 = vmatprep.subr.bf16.mxu0 0
    %566 = vmatpush1.bf16.msra.mxu0 %v547
    %567 = vmatprep.subr.bf16.mxu0 0
    %568 = vmatpush1.bf16.msra.mxu0 %v548
    %569 = vmatprep.subr.bf16.mxu0 0
    %570 = vmatpush1.bf16.msra.mxu0 %v549
    %571 = vmatprep.subr.bf16.mxu0 0
    %572 = vmatpush1.bf16.msra.mxu0 %v550
    %573 = vmatprep.subr.bf16.mxu0 0
    %574 = vmatpush1.bf16.msra.mxu0 %v551
    %575 = vmatprep.subr.bf16.mxu0 0
    %576 = vmatpush1.bf16.msra.mxu0 %v552
    %577 = vmatprep.subr.bf16.mxu0 0
    %578 = vmatpush1.bf16.msra.mxu0 0
    %579 = vmatprep.subr.bf16.mxu0 0
    %580 = vmatpush1.bf16.msra.mxu0 0
    %581 = vmatprep.subr.bf16.mxu0 0
    %582 = vmatpush1.bf16.msra.mxu0 0
    %583 = vmatprep.subr.bf16.mxu0 0
    %584 = vmatpush1.bf16.msra.mxu0 0
    %585 = vmatprep.subr.bf16.mxu0 0
    %586 = vmatpush1.bf16.msra.mxu0 0
    %587 = vmatprep.subr.bf16.mxu0 0
    %588 = vmatpush1.bf16.msra.mxu0 0
    %589 = vmatprep.subr.bf16.mxu0 0
    %590 = vmatpush1.bf16.msra.mxu0 0
    %591 = vmatprep.subr.bf16.mxu0 0
    %592 = vmatpush1.bf16.msra.mxu0 0
    %593 = vmatprep.mubr.bf16.mxu0 0
    %594 = vmatmul.mubr.bf16.gmra.mrb[0].mxu0 %v489
    %v595 = vpop.f32.mrb[0].mxu0
    %v596 = vadd.f32 0.0, %v595
    %v597 = vpop.f32.mrb[0].mxu0
    %v598 = vpop.f32.mrb[0].mxu0
    %v599 = vadd.f32 0.0, %v598
    %v600 = vpop.f32.mrb[0].mxu0
    %601 = vmatprep.mubr.bf16.mxu0 0
    %602 = vmatmul.mubr.bf16.gmra.mrb[0].mxu0 %v490
    %v603 = vpop.f32.mrb[0].mxu0
    %v604 = vadd.f32 0.0, %v603
    %v605 = vpop.f32.mrb[0].mxu0
    %v606 = vpop.f32.mrb[0].mxu0
    %v607 = vadd.f32 0.0, %v606
    %v608 = vpop.f32.mrb[0].mxu0
    %609 = vmatprep.mubr.bf16.mxu0 0
    %610 = vmatmul.mubr.bf16.gmra.mrb[0].mxu0 %v491
    %v611 = vpop.f32.mrb[0].mxu0
    %v612 = vadd.f32 0.0, %v611
    %v613 = vpop.f32.mrb[0].mxu0
    %v614 = vpop.f32.mrb[0].mxu0
    %v615 = vadd.f32 0.0, %v614
    %v616 = vpop.f32.mrb[0].mxu0
    %617 = vmatprep.mubr.bf16.mxu0 0
    %618 = vmatmul.mubr.bf16.gmra.mrb[0].mxu0 %v492
    %v619 = vpop.f32.mrb[0].mxu0
    %v620 = vadd.f32 0.0, %v619
    %v621 = vpop.f32.mrb[0].mxu0
    %v622 = vpop.f32.mrb[0].mxu0
    %v623 = vadd.f32 0.0, %v622
    %v624 = vpop.f32.mrb[0].mxu0
    %625 = vmatprep.mubr.bf16.mxu0 0
    %626 = vmatmul.mubr.bf16.gmra.mrb[0].mxu0 %v493
    %v627 = vpop.f32.mrb[0].mxu0
    %v628 = vadd.f32 0.0, %v627
    %v629 = vpop.f32.mrb[0].mxu0
    %v630 = vpop.f32.mrb[0].mxu0
    %v631 = vadd.f32 0.0, %v630
    %v632 = vpop.f32.mrb[0].mxu0
    %633 = vmatprep.mubr.bf16.mxu0 0
    %634 = vmatmul.mubr.bf16.gmra.mrb[0].mxu0 %v494
    %v635 = vpop.f32.mrb[0].mxu0
    %v636 = vadd.f32 0.0, %v635
    %v637 = vpop.f32.mrb[0].mxu0
    %v638 = vpop.f32.mrb[0].mxu0
    %v639 = vadd.f32 0.0, %v638
    %v640 = vpop.f32.mrb[0].mxu0
    %641 = vmatprep.mubr.bf16.mxu0 0
    %642 = vmatmul.mubr.bf16.gmra.mrb[0].mxu0 %v495
    %v643 = vpop.f32.mrb[0].mxu0
    %v644 = vadd.f32 0.0, %v643
    %v645 = vpop.f32.mrb[0].mxu0
    %v646 = vpop.f32.mrb[0].mxu0
    %v647 = vadd.f32 0.0, %v646
    %v648 = vpop.f32.mrb[0].mxu0
    %649 = vmatprep.mubr.bf16.mxu0 0
    %650 = vmatmul.mubr.bf16.gmra.mrb[0].mxu0 %v496
    %v651 = vpop.f32.mrb[0].mxu0
    %v652 = vadd.f32 0.0, %v651
    %v653 = vpop.f32.mrb[0].mxu0
    %v654 = vpop.f32.mrb[0].mxu0
    %v655 = vadd.f32 0.0, %v654
    %v656 = vpop.f32.mrb[0].mxu0
    %657 = vdwg.mxu0
    %v658 = vpack.c.bf16 %v599, %v596
    %v659 = vpack.c.bf16 %v607, %v604
    %v660 = vpack.c.bf16 %v615, %v612
    %v661 = vpack.c.bf16 %v623, %v620
    %v662 = vpack.c.bf16 %v631, %v628
    %v663 = vpack.c.bf16 %v639, %v636
    %v664 = vpack.c.bf16 %v647, %v644
    %v665 = vpack.c.bf16 %v655, %v652
    %v666 = vld [vmem:[%s5] sm:$0x1]
    %v668 = vlaneseq
    %v669 = vshrl.u32 %v668, 7
    %v670 = vsub.s32 0, %v669
    %v671 = vrot.slane %v666, %v670
    %673 = vmatprep.subr.bf16.mxu0 0
    %674 = vmatpush1.bf16.msra.mxu0 %v658
    %675 = vmatprep.subr.bf16.mxu0 0
    %676 = vmatpush1.bf16.msra.mxu0 %v659
    %677 = vmatprep.subr.bf16.mxu0 0
    %678 = vmatpush1.bf16.msra.mxu0 %v660
    %679 = vmatprep.subr.bf16.mxu0 0
    %680 = vmatpush1.bf16.msra.mxu0 %v661
    %681 = vmatprep.subr.bf16.mxu0 0
    %682 = vmatpush1.bf16.msra.mxu0 %v662
    %683 = vmatprep.subr.bf16.mxu0 0
    %684 = vmatpush1.bf16.msra.mxu0 %v663
    %685 = vmatprep.subr.bf16.mxu0 0
    %686 = vmatpush1.bf16.msra.mxu0 %v664
    %687 = vmatprep.subr.bf16.mxu0 0
    %688 = vmatpush1.bf16.msra.mxu0 %v665
    %689 = vmatprep.subr.bf16.mxu0 0
    %690 = vmatpush1.bf16.msra.mxu0 0
    %691 = vmatprep.subr.bf16.mxu0 0
    %692 = vmatpush1.bf16.msra.mxu0 0
    %693 = vmatprep.subr.bf16.mxu0 0
    %694 = vmatpush1.bf16.msra.mxu0 0
    %695 = vmatprep.subr.bf16.mxu0 0
    %696 = vmatpush1.bf16.msra.mxu0 0
    %697 = vmatprep.subr.bf16.mxu0 0
    %698 = vmatpush1.bf16.msra.mxu0 0
    %699 = vmatprep.subr.bf16.mxu0 0
    %700 = vmatpush1.bf16.msra.mxu0 0
    %701 = vmatprep.subr.bf16.mxu0 0
    %702 = vmatpush1.bf16.msra.mxu0 0
    %703 = vmatprep.subr.bf16.mxu0 0
    %704 = vmatpush1.bf16.msra.mxu0 0
    %705 = vmatprep.mubr.bf16.mxu0 0
    %706 = vmatmul.mubr.bf16.gmra.mrb[0].mxu0 %v360
    %v707 = vpop.f32.mrb[0].mxu0
    %v708 = vadd.f32 %v671, %v707
    %v709 = vpop.f32.mrb[0].mxu0
    %v710 = vpop.f32.mrb[0].mxu0
    %v711 = vadd.f32 %v671, %v710
    %v712 = vpop.f32.mrb[0].mxu0
    %713 = vmatprep.mubr.bf16.mxu0 0
    %714 = vmatmul.mubr.bf16.gmra.mrb[0].mxu0 %v361
    %v715 = vpop.f32.mrb[0].mxu0
    %v716 = vadd.f32 %v671, %v715
    %v717 = vpop.f32.mrb[0].mxu0
    %v718 = vpop.f32.mrb[0].mxu0
    %v719 = vadd.f32 %v671, %v718
    %v720 = vpop.f32.mrb[0].mxu0
    %721 = vmatprep.mubr.bf16.mxu0 0
    %722 = vmatmul.mubr.bf16.gmra.mrb[0].mxu0 %v362
    %v723 = vpop.f32.mrb[0].mxu0
    %v724 = vadd.f32 %v671, %v723
    %v725 = vpop.f32.mrb[0].mxu0
    %v726 = vpop.f32.mrb[0].mxu0
    %v727 = vadd.f32 %v671, %v726
    %v728 = vpop.f32.mrb[0].mxu0
    %729 = vmatprep.mubr.bf16.mxu0 0
    %730 = vmatmul.mubr.bf16.gmra.mrb[0].mxu0 %v363
    %v731 = vpop.f32.mrb[0].mxu0
    %v732 = vadd.f32 %v671, %v731
    %v733 = vpop.f32.mrb[0].mxu0
    %v734 = vpop.f32.mrb[0].mxu0
    %v735 = vadd.f32 %v671, %v734
    %v736 = vpop.f32.mrb[0].mxu0
    %737 = vmatprep.mubr.bf16.mxu0 0
    %738 = vmatmul.mubr.bf16.gmra.mrb[0].mxu0 %v364
    %v739 = vpop.f32.mrb[0].mxu0
    %v740 = vadd.f32 %v671, %v739
    %v741 = vpop.f32.mrb[0].mxu0
    %v742 = vpop.f32.mrb[0].mxu0
    %v743 = vadd.f32 %v671, %v742
    %v744 = vpop.f32.mrb[0].mxu0
    %745 = vmatprep.mubr.bf16.mxu0 0
    %746 = vmatmul.mubr.bf16.gmra.mrb[0].mxu0 %v365
    %v747 = vpop.f32.mrb[0].mxu0
    %v748 = vadd.f32 %v671, %v747
    %v749 = vpop.f32.mrb[0].mxu0
    %v750 = vpop.f32.mrb[0].mxu0
    %v751 = vadd.f32 %v671, %v750
    %v752 = vpop.f32.mrb[0].mxu0
    %753 = vmatprep.mubr.bf16.mxu0 0
    %754 = vmatmul.mubr.bf16.gmra.mrb[0].mxu0 %v366
    %v755 = vpop.f32.mrb[0].mxu0
    %v756 = vadd.f32 %v671, %v755
    %v757 = vpop.f32.mrb[0].mxu0
    %v758 = vpop.f32.mrb[0].mxu0
    %v759 = vadd.f32 %v671, %v758
    %v760 = vpop.f32.mrb[0].mxu0
    %761 = vmatprep.mubr.bf16.mxu0 0
    %762 = vmatmul.mubr.bf16.gmra.mrb[0].mxu0 %v367
    %v763 = vpop.f32.mrb[0].mxu0
    %v764 = vadd.f32 %v671, %v763
    %v765 = vpop.f32.mrb[0].mxu0
    %v766 = vpop.f32.mrb[0].mxu0
    %v767 = vadd.f32 %v671, %v766
    %v768 = vpop.f32.mrb[0].mxu0
    %769 = vdwg.mxu0
    %v770 = vadd.f32 %v708, %v297
    %v771 = vadd.f32 %v711, %v298
    %v772 = vadd.f32 %v716, %v299
    %v773 = vadd.f32 %v719, %v300
    %v774 = vadd.f32 %v724, %v301
    %v775 = vadd.f32 %v727, %v302
    %v776 = vadd.f32 %v732, %v303
    %v777 = vadd.f32 %v735, %v304
    %v778 = vadd.f32 %v740, %v305
    %v779 = vadd.f32 %v743, %v306
    %v780 = vadd.f32 %v748, %v307
    %v781 = vadd.f32 %v751, %v308
    %v782 = vadd.f32 %v756, %v309
    %v783 = vadd.f32 %v759, %v310
    %v784 = vadd.f32 %v764, %v311
    %v785 = vadd.f32 %v767, %v312
    %v786 = vmax.f32 %v770, 0.0
    %v787 = vmax.f32 %v771, 0.0
    %v788 = vmax.f32 %v772, 0.0
    %v789 = vmax.f32 %v773, 0.0
    %v790 = vmax.f32 %v774, 0.0
    %v791 = vmax.f32 %v775, 0.0
    %v792 = vmax.f32 %v776, 0.0
    %v793 = vmax.f32 %v777, 0.0
    %v794 = vmax.f32 %v778, 0.0
    %v795 = vmax.f32 %v779, 0.0
    %v796 = vmax.f32 %v780, 0.0
    %v797 = vmax.f32 %v781, 0.0
    %v798 = vmax.f32 %v782, 0.0
    %v799 = vmax.f32 %v783, 0.0
    %v800 = vmax.f32 %v784, 0.0
    %v801 = vmax.f32 %v785, 0.0
    %802 = vst [vmem:[#allocation7] sm:$0xff] %v786
    %803 = vst [vmem:[#allocation7 + $0x8] sm:$0xff] %v787
    %804 = vst [vmem:[#allocation7 + $0x10] sm:$0xff] %v788
    %805 = vst [vmem:[#allocation7 + $0x18] sm:$0xff] %v789
    %806 = vst [vmem:[#allocation7 + $0x20] sm:$0xff] %v790
    %807 = vst [vmem:[#allocation7 + $0x28] sm:$0xff] %v791
    %808 = vst [vmem:[#allocation7 + $0x30] sm:$0xff] %v792
    %809 = vst [vmem:[#allocation7 + $0x38] sm:$0xff] %v793
    %810 = vst [vmem:[#allocation7 + $0x40] sm:$0xff] %v794
    %811 = vst [vmem:[#allocation7 + $0x48] sm:$0xff] %v795
    %812 = vst [vmem:[#allocation7 + $0x50] sm:$0xff] %v796
    %813 = vst [vmem:[#allocation7 + $0x58] sm:$0xff] %v797
    %814 = vst [vmem:[#allocation7 + $0x60] sm:$0xff] %v798
    %815 = vst [vmem:[#allocation7 + $0x68] sm:$0xff] %v799
    %816 = vst [vmem:[#allocation7 + $0x70] sm:$0xff] %v800
    %817 = vst [vmem:[#allocation7 + $0x78] sm:$0xff] %v801
    // Predicated region
    $region38: #{tpu_custom_call.1} parent=1 // pred_check
      _
    $region39: #{tpu_custom_call.1} parent=1 // pred_check_branch
      %819 = sbr.rel (0) target = $region41
    $region40: #{tpu_custom_call.1} parent=1 // pred_region
      %s821 = ssub.s32 2048, 2048
      %822 = vsyncadd [#allocation4], %s821
      %s823 = sshll.u32 [#allocation7], 4
      %s824 = int_to_ptr.vmem [resolvable:$true] %s823
      %829 = dma.vmem_to_hbm [thread:$0]  %s824, 2048, %s7, [#allocation4], 128, 128, 8
    $region41: #{tpu_custom_call.1} parent=1 // pred_fallthru
      _
    // Predicated region
    $region42: #{tpu_custom_call.1} parent=1 // pred_check
      _
    $region43: #{tpu_custom_call.1} parent=1 // pred_check_branch
      %831 = sbr.rel (0) target = $region45
    $region44: #{tpu_custom_call.1} parent=1 // pred_region
      %832 = dma.done [#allocation4], 2048
    $region45: #{tpu_custom_call.1} parent=1 // pred_fallthru
      _
    %833 = vsyncpa [#allocation3], 1
    %834 = vsyncpa [#allocation6], 1
    %835 = vsyncpa [#allocation4], 1

</llo_original>
